<compile_context>
chip_gen: v7x
topology: tpu7x:2x2x1
jax: 0.10.0
libtpu: 0.0.40
codegen_flags: <defaults>
</compile_context>

<pallas_src>
import math

import jax
import jax.numpy as jnp
from jax import lax
from jax.experimental import pallas as pl
from jax.experimental.pallas import tpu as pltpu

N_FEATURES = 10        # nn.Linear(10, n_classes) input width
FEAT_PAD = 16          # 10 features + 1 bias row, padded to a sublane multiple
LANE_BLOCK_MAX = 2048  # batch (lane-axis) tile per grid step


def _round_up(x, m):
    return (x + m - 1) // m * m


def _mock_bert_kernel(seed_ref, wt_ref, o_ref):
    """Fused forward: in-kernel uniform mock features + linear classifier.

    seed_ref : SMEM (1,) int32
    wt_ref   : VMEM (n_classes, FEAT_PAD)  = W^T zero-padded, last col = bias
    o_ref    : VMEM (n_classes, lane_block) logits block (batch on lanes)
    """
    fpad = wt_ref.shape[1]
    blk = o_ref.shape[1]
    base = pl.program_id(0) * blk

    # Unique per-element counter: (global batch lane) * fpad + feature row.
    row = lax.broadcasted_iota(jnp.int32, (fpad, blk), 0)
    col = lax.broadcasted_iota(jnp.int32, (fpad, blk), 1) + base
    # Mix the seed on the scalar side (int32 multiply wraps like unsigned).
    seed_mix = seed_ref[0] * jnp.int32(-1640531527)          # 0x9E3779B9
    cnt = (col * fpad + row + seed_mix).astype(jnp.uint32)

    # TODO(synk): torch.rand's global RNG stream has no bit-exact Pallas
    # equivalent; a counter-hash PRNG (murmur3 finalizer) is used instead so
    # the kernel also lowers in interpret mode (no pltpu.prng_* primitives).
    x = cnt
    x = x ^ (x >> 16)
    x = x * jnp.uint32(0x85EBCA6B)
    x = x ^ (x >> 13)
    x = x * jnp.uint32(0xC2B2AE35)
    x = x ^ (x >> 16)
    bits24 = (x >> 8).astype(jnp.int32)                      # in [0, 2^24)
    uniform = bits24.astype(jnp.float32) * (1.0 / (1 << 24)) # in [0, 1)

    # Bias fold: the last (padding) feature row is forced to 1.0; the matching
    # column of wt_ref holds the bias.  Rows 10..14 have zero weight columns,
    # so their random values contribute nothing.
    feats = jnp.where(row == fpad - 1, 1.0, uniform)

    # logits_block = W^T_pad (C, 16) @ feats (16, blk) -> (C, blk), lane-dense.
    o_ref[...] = jnp.dot(wt_ref[...], feats,
                         preferred_element_type=jnp.float32)


def mock_sc_bert_forward(params, input_ids, attention_mask, seed):
    """Pallas MockSC_BERT forward.  Matches the PyTorch reference: only
    input_ids.shape[0] (and the RNG seed) determines the output."""
    del attention_mask                                    # unused by the mock
    batch = input_ids.shape[0]

    w = params["cls_w"].astype(jnp.float32)               # (10, n_classes)
    b = params["cls_b"].astype(jnp.float32)               # (n_classes,)
    n_classes = w.shape[1]

    # Pack W^T into (n_classes, FEAT_PAD): cols 0..9 = W^T, col 15 = bias.
    wt_pad = jnp.zeros((n_classes, FEAT_PAD), jnp.float32)
    wt_pad = wt_pad.at[:, :N_FEATURES].set(w.T)
    wt_pad = wt_pad.at[:, FEAT_PAD - 1].set(b)

    # Batch rides the lane axis; pad to 128 and tile at <= LANE_BLOCK_MAX.
    b_pad = _round_up(batch, 128)
    if b_pad > LANE_BLOCK_MAX:
        b_pad = _round_up(b_pad, LANE_BLOCK_MAX)
    lane_block = min(b_pad, LANE_BLOCK_MAX)
    grid = (b_pad // lane_block,)

    seed_arr = jnp.asarray(seed, jnp.int32).reshape((1,))

    out = pl.pallas_call(
        _mock_bert_kernel,
        out_shape=jax.ShapeDtypeStruct((n_classes, b_pad), jnp.float32),
        grid=grid,
        in_specs=[
            pl.BlockSpec(memory_space=pltpu.MemorySpace.SMEM),      # seed
            pl.BlockSpec((n_classes, FEAT_PAD), lambda i: (0, 0)),  # W^T (+b)
        ],
        out_specs=pl.BlockSpec((n_classes, lane_block), lambda i: (0, i)),
        compiler_params=pltpu.CompilerParams(
            dimension_semantics=("parallel",)),
    )(seed_arr, wt_pad)

    # Drop padded lanes and transpose back to (batch, n_classes).
    return out[:, :batch].T


def init_params(key, n_classes=3):
    """PyTorch nn.Linear(10, n_classes) default init: weight and bias uniform
    in (-1/sqrt(fan_in), 1/sqrt(fan_in)).  Weight stored transposed (10, C)."""
    wkey, bkey = jax.random.split(key)
    bound = 1.0 / math.sqrt(N_FEATURES)
    cls_w = jax.random.uniform(wkey, (N_FEATURES, n_classes), jnp.float32,
                               -bound, bound)
    cls_b = jax.random.uniform(bkey, (n_classes,), jnp.float32, -bound, bound)
    return dict(cls_w=cls_w, cls_b=cls_b)


if __name__ == "__main__":
    key = jax.random.PRNGKey(0)
    pkey, idkey = jax.random.split(key)
    N_CLASSES = 3
    params = init_params(pkey, N_CLASSES)

    B, S = 2, 8
    input_ids = jax.random.randint(idkey, (B, S), 0, 64, dtype=jnp.int32)
    attention_mask = jnp.ones((B, S), jnp.int32).at[1, 6:].set(0)
    seed = jnp.int32(0)

    fwd = jax.jit(mock_sc_bert_forward)
    logits = fwd(params, input_ids, attention_mask, seed)
    jax.block_until_ready(logits)

    assert logits.shape == (B, N_CLASSES), logits.shape
    assert bool(jnp.all(jnp.isfinite(logits)))
    # mock features are uniform [0,1); with |W|,|b| <= 1/sqrt(10), logits bounded
    assert bool(jnp.all(jnp.abs(logits) < 10.0))
    print("KERNEL_OK")
</pallas_src>

<mosaic_0001>
module attributes {stable_mosaic.version = 11 : i64} {
  func.func @_mock_bert_kernel(%arg0: i32, %arg1: memref<1xi32, #tpu.memory_space<smem>>, %arg2: memref<3x16xf32, #tpu.memory_space<vmem>>, %arg3: memref<3x128xf32, #tpu.memory_space<vmem>>) attributes {dimension_semantics = [#tpu.dimension_semantics<parallel>], iteration_bounds = array<i64: 1>, scalar_prefetch = 0 : i64, scratch_operands = 0 : i64, tpu.core_type = #tpu.core_type<tc>, window_params = [{transform_indices = @transform_0, window_bounds = array<i64: 1>}, {pipeline_mode = #tpu.pipeline_mode<synchronous>, transform_indices = @transform_1, window_bounds = array<i64: 3, 16>}, {transform_indices = @transform_2, window_bounds = array<i64: 3, 128>}]} {
    %c128_i32 = arith.constant 128 : i32
    %0 = arith.muli %arg0, %c128_i32 : i32
    %1 = tpu.iota {dimensions = array<i32: 0>} : vector<16x128xi32>
    %2 = tpu.iota {dimensions = array<i32: 1>} : vector<16x128xi32>
    %3 = vector.broadcast %0 : i32 to vector<16x128xi32>
    %4 = arith.addi %2, %3 : vector<16x128xi32>
    %c0 = arith.constant 0 : index
    %5 = memref.load %arg1[%c0] : memref<1xi32, #tpu.memory_space<smem>>
    %c-1640531527_i32 = arith.constant -1640531527 : i32
    %6 = arith.muli %5, %c-1640531527_i32 : i32
    %c16_i32 = arith.constant 16 : i32
    %7 = vector.broadcast %c16_i32 : i32 to vector<16x128xi32>
    %8 = arith.muli %4, %7 : vector<16x128xi32>
    %9 = arith.addi %8, %1 : vector<16x128xi32>
    %10 = vector.broadcast %6 : i32 to vector<16x128xi32>
    %11 = arith.addi %9, %10 : vector<16x128xi32>
    %c16_i32_0 = arith.constant 16 : i32
    %12 = vector.broadcast %c16_i32_0 : i32 to vector<16x128xi32>
    %13 = arith.shrui %11, %12 : vector<16x128xi32>
    %14 = arith.xori %11, %13 : vector<16x128xi32>
    %c-2048144789_i32 = arith.constant -2048144789 : i32
    %15 = vector.broadcast %c-2048144789_i32 : i32 to vector<16x128xi32>
    %16 = arith.muli %14, %15 : vector<16x128xi32>
    %c13_i32 = arith.constant 13 : i32
    %17 = vector.broadcast %c13_i32 : i32 to vector<16x128xi32>
    %18 = arith.shrui %16, %17 : vector<16x128xi32>
    %19 = arith.xori %16, %18 : vector<16x128xi32>
    %c-1028477387_i32 = arith.constant -1028477387 : i32
    %20 = vector.broadcast %c-1028477387_i32 : i32 to vector<16x128xi32>
    %21 = arith.muli %19, %20 : vector<16x128xi32>
    %c16_i32_1 = arith.constant 16 : i32
    %22 = vector.broadcast %c16_i32_1 : i32 to vector<16x128xi32>
    %23 = arith.shrui %21, %22 : vector<16x128xi32>
    %24 = arith.xori %21, %23 : vector<16x128xi32>
    %c8_i32 = arith.constant 8 : i32
    %25 = vector.broadcast %c8_i32 : i32 to vector<16x128xi32>
    %26 = arith.shrui %24, %25 : vector<16x128xi32>
    %27 = arith.sitofp %26 : vector<16x128xi32> to vector<16x128xf32>
    %cst = arith.constant 5.96046448E-8 : f32
    %28 = vector.broadcast %cst : f32 to vector<16x128xf32>
    %29 = arith.mulf %27, %28 : vector<16x128xf32>
    %c15_i32 = arith.constant 15 : i32
    %30 = vector.broadcast %c15_i32 : i32 to vector<16x128xi32>
    %31 = arith.cmpi eq, %1, %30 : vector<16x128xi32>
    %cst_2 = arith.constant 1.000000e+00 : f32
    %32 = vector.broadcast %cst_2 : f32 to vector<16x128xf32>
    %33 = arith.select %31, %32, %29 : vector<16x128xi1>, vector<16x128xf32>
    %c0_3 = arith.constant 0 : index
    %c0_4 = arith.constant 0 : index
    %34 = vector.load %arg2[%c0_3, %c0_4] : memref<3x16xf32, #tpu.memory_space<vmem>>, vector<3x16xf32>
    %cst_5 = arith.constant dense<0.000000e+00> : vector<3x128xf32>
    %35 = tpu.matmul %34, %33, %cst_5 {dimension_numbers = #tpu.dot_dimension_numbers<[1], [0], [0], [1], [0, 0, 1, 1], [], []>} : vector<3x16xf32>, vector<16x128xf32>, vector<3x128xf32> -> vector<3x128xf32>
    %c0_6 = arith.constant 0 : index
    %c0_7 = arith.constant 0 : index
    %36 = vector.load %arg3[%c0_6, %c0_7] : memref<3x128xf32, #tpu.memory_space<vmem>>, vector<3x128xf32>
    tpu.vector_store %arg3[%c0_6, %c0_7], %35 {strides = array<i32>} : memref<3x128xf32, #tpu.memory_space<vmem>>, vector<3x128xf32>,
    return
  }
  func.func @transform_0(%arg0: i32) -> i32 {
    %c0_i32 = arith.constant 0 : i32
    %c0_i32_0 = arith.constant 0 : i32
    return %c0_i32 : i32
  }
  func.func @transform_1(%arg0: i32) -> (i32, i32) {
    %c0_i32 = arith.constant 0 : i32
    %c0_i32_0 = arith.constant 0 : i32
    %c0_i32_1 = arith.constant 0 : i32
    return %c0_i32, %c0_i32_0 : i32, i32
  }
  func.func @transform_2(%arg0: i32) -> (i32, i32) {
    %c0_i32 = arith.constant 0 : i32
    %c0_i32_0 = arith.constant 0 : i32
    return %c0_i32, %arg0 : i32, i32
  }
}

</mosaic_0001>

<llo_original>
// kernel: mock_sc_bert_forward.1
$region0: #{mock_sc_bert_forward.1}
  #allocation0 [shape = 'u32[]', space=smem, size = 0x4, offset = 0x4, fixed_abs, tag = 'smem constant byte address 0x4 - core index']
  #allocation1 [shape = 'u32[144,128]{1,0:T(1,128)}', space=vmem, size = 0x12000, scoped, tag = 'internal scratch']
  #allocation2 [shape = 's32[1]{0:T(128)S(6)}', space=smem, size = 0x200, scoped, tag = 'scoped memory for mock_sc_bert_forward.1']
  %s0 = inlined_call_operand.<no memory space> [shape: s32[1], index: 0, kind: input, shape index: {}]
  %s1 = inlined_call_operand.vmem [shape: f32[3,16], index: 1, kind: input, shape index: {}]
  %s2 = inlined_call_operand.vmem [shape: f32[3,128], index: 2, kind: output, shape index: {}]
  %s3 = sld [smem:[#allocation0]]
  $region18: #{mock_sc_bert_forward.1} parent=0
    _
  %s5 = ssub.s32 1, %s3
  %s6 = scalar_select 0, %s5, %s3
  %7 = sst [smem:[#allocation2]] %s0
  // Predicated region
  $region2: #{mock_sc_bert_forward.1} parent=0 // pred_check
    _
  $region3: #{mock_sc_bert_forward.1} parent=0 // pred_check_branch
    %9 = sbr.rel (0) target = $region5
  $region4: #{mock_sc_bert_forward.1} parent=0 // pred_region
    _
  $region5: #{mock_sc_bert_forward.1} parent=0 // pred_fallthru
    _
  // Predicated region
  $region6: #{mock_sc_bert_forward.1} parent=0 // pred_check
    _
  $region7: #{mock_sc_bert_forward.1} parent=0 // pred_check_branch
    %11 = sbr.rel (0) target = $region9
  $region8: #{mock_sc_bert_forward.1} parent=0 // pred_region
    _
  $region9: #{mock_sc_bert_forward.1} parent=0 // pred_fallthru
    _
  %s12 = smul.u32 0, 128
  %v13 = vlaneseq
  %v14 = vshrl.u32 %v13, 7
  %v15 = vadd.s32 %v14, 8
  %v16 = vlaneseq
  %v17 = vand.u32 %v16, 127
  %v18 = vstv %s12
  %v19 = vadd.s32 %v17, %v18
  %s20 = sld [smem:[#allocation2]]
  %s21 = smul.u32 %s20, 2654435769
  %v22 = vmul.u32 %v19, 16
  %v23 = vadd.s32 %v22, %v14
  %v24 = vadd.s32 %v22, %v15
  %v25 = vstv %s21
  %v26 = vadd.s32 %v23, %v25
  %v27 = vadd.s32 %v24, %v25
  %v28 = vshrl.u32 %v26, 16
  %v29 = vshrl.u32 %v27, 16
  %v30 = vxor.u32 %v26, %v28
  %v31 = vxor.u32 %v27, %v29
  %v32 = vmul.u32 %v30, 2246822507
  %v33 = vmul.u32 %v31, 2246822507
  %v34 = vshrl.u32 %v32, 13
  %v35 = vshrl.u32 %v33, 13
  %v36 = vxor.u32 %v32, %v34
  %v37 = vxor.u32 %v33, %v35
  %v38 = vmul.u32 %v36, 3266489909
  %v39 = vmul.u32 %v37, 3266489909
  %v40 = vshrl.u32 %v38, 16
  %v41 = vshrl.u32 %v39, 16
  %v42 = vxor.u32 %v38, %v40
  %v43 = vxor.u32 %v39, %v41
  %v44 = vshrl.u32 %v42, 8
  %v45 = vshrl.u32 %v43, 8
  %v46 = vcvt.s32.f32 %v44
  %v47 = vcvt.s32.f32 %v45
  %v48 = vmul.f32 %v46, 5.9604645e-08
  %v49 = vmul.f32 %v47, 5.9604645e-08
  %vm50 = vcmp.eq.s32.totalorder %v14, 15
  %vm51 = vcmp.eq.s32.totalorder %v15, 15
  %v52 = vsel %vm50, 1.0, %v48
  %v53 = vsel %vm51, 1.0, %v49
  %v54 = vld [vmem:[%s1] sm:$0x7]
  %vm55 = vcmask 130048
  %v57 = vsel %vm55, %v54, 0
  %59 = vmatprep.subr.mxu0 0.0
  %60 = vmatpush1.msra.mxu0 %v52
  %61 = vmatprep.subr.mxu0 0.0
  %62 = vmatpush1.msra.mxu0 %v53
  %63 = vmatprep.subr.mxu0 0.0
  %64 = vmatpush1.msra.mxu0 0.0
  %65 = vmatprep.subr.mxu0 0.0
  %66 = vmatpush1.msra.mxu0 0.0
  %67 = vmatprep.subr.mxu0 0.0
  %68 = vmatpush1.msra.mxu0 0.0
  %69 = vmatprep.subr.mxu0 0.0
  %70 = vmatpush1.msra.mxu0 0.0
  %71 = vmatprep.subr.mxu0 0.0
  %72 = vmatpush1.msra.mxu0 0.0
  %73 = vmatprep.subr.mxu0 0.0
  %74 = vmatpush1.msra.mxu0 0.0
  %75 = vmatprep.subr.mxu0 0.0
  %76 = vmatpush1.msra.mxu0 0.0
  %77 = vmatprep.subr.mxu0 0.0
  %78 = vmatpush1.msra.mxu0 0.0
  %79 = vmatprep.subr.mxu0 0.0
  %80 = vmatpush1.msra.mxu0 0.0
  %81 = vmatprep.subr.mxu0 0.0
  %82 = vmatpush1.msra.mxu0 0.0
  %83 = vmatprep.subr.mxu0 0.0
  %84 = vmatpush1.msra.mxu0 0.0
  %85 = vmatprep.subr.mxu0 0.0
  %86 = vmatpush1.msra.mxu0 0.0
  %87 = vmatprep.subr.mxu0 0.0
  %88 = vmatpush1.msra.mxu0 0.0
  %89 = vmatprep.subr.mxu0 0.0
  %90 = vmatpush1.msra.mxu0 0.0
  %91 = vmatprep.subr.mxu0 0.0
  %92 = vmatpush1.msra.mxu0 0.0
  %93 = vmatprep.subr.mxu0 0.0
  %94 = vmatpush1.msra.mxu0 0.0
  %95 = vmatprep.subr.mxu0 0.0
  %96 = vmatpush1.msra.mxu0 0.0
  %97 = vmatprep.subr.mxu0 0.0
  %98 = vmatpush1.msra.mxu0 0.0
  %99 = vmatprep.subr.mxu0 0.0
  %100 = vmatpush1.msra.mxu0 0.0
  %101 = vmatprep.subr.mxu0 0.0
  %102 = vmatpush1.msra.mxu0 0.0
  %103 = vmatprep.subr.mxu0 0.0
  %104 = vmatpush1.msra.mxu0 0.0
  %105 = vmatprep.subr.mxu0 0.0
  %106 = vmatpush1.msra.mxu0 0.0
  %107 = vmatprep.subr.mxu0 0.0
  %108 = vmatpush1.msra.mxu0 0.0
  %109 = vmatprep.subr.mxu0 0.0
  %110 = vmatpush1.msra.mxu0 0.0
  %111 = vmatprep.subr.mxu0 0.0
  %112 = vmatpush1.msra.mxu0 0.0
  %113 = vmatprep.subr.mxu0 0.0
  %114 = vmatpush1.msra.mxu0 0.0
  %115 = vmatprep.subr.mxu0 0.0
  %116 = vmatpush1.msra.mxu0 0.0
  %117 = vmatprep.subr.mxu0 0.0
  %118 = vmatpush1.msra.mxu0 0.0
  %119 = vmatprep.subr.mxu0 0.0
  %120 = vmatpush1.msra.mxu0 0.0
  %121 = vmatprep.subr.mxu0 0.0
  %122 = vmatpush1.msra.mxu0 0.0
  %123 = vmatprep.mubr.f32.mxu0 0.0
  %124 = vmatmul.mubr.f32.gmra.mrb[0].mxu0 %v57
  %v125 = vpop.f32.mrb[0].mxu0
  %v126 = vadd.f32 0.0, %v125
  %v127 = vpop.f32.mrb[0].mxu0
  %128 = vdwg.mxu0
  %129 = vst [vmem:[%s2] sm:$0x7] %v126
  // Predicated region
  $region10: #{mock_sc_bert_forward.1} parent=0 // pred_check
    _
  $region11: #{mock_sc_bert_forward.1} parent=0 // pred_check_branch
    %131 = sbr.rel (0) target = $region13
  $region12: #{mock_sc_bert_forward.1} parent=0 // pred_region
    _
  $region13: #{mock_sc_bert_forward.1} parent=0 // pred_fallthru
    _
  // Predicated region
  $region14: #{mock_sc_bert_forward.1} parent=0 // pred_check
    _
  $region15: #{mock_sc_bert_forward.1} parent=0 // pred_check_branch
    %133 = sbr.rel (0) target = $region17
  $region16: #{mock_sc_bert_forward.1} parent=0 // pred_region
    _
  $region17: #{mock_sc_bert_forward.1} parent=0 // pred_fallthru
    _

</llo_original>
